<compile_context>
chip_gen: v6e
topology: v6e:2x2x1
jax: 0.10.0
libtpu: 0.0.40
codegen_flags: <defaults>
</compile_context>

<pallas_src>
import jax
import jax.numpy as jnp
from jax import lax
from jax.experimental import pallas as pl
from jax.experimental.pallas import tpu as pltpu

LANES = 128
SUBLANES = 8
ROW_ALIGN = 32                 # legal sublane multiple for f32/bf16/int8/fp8
MAX_CORES = 2                  # leading "parallel" grid axis (v7x megacore)
TARGET_BLOCK_BYTES = 2 << 20   # ~2 MiB per input buffer per pipeline slot


def _psnr_from_mse(mse, data_range):
    base = jnp.float32(10.0)
    psnr_base_e = 2.0 * jnp.log(jnp.float32(data_range)) - jnp.log(mse)
    return psnr_base_e * (base / jnp.log(base))


def _make_sse_kernel(rows: int, block_rows: int, num_row_tiles: int,
                     tiles_per_core: int, needs_tail_mask: bool,
                     has_clamped_tiles: bool):
    """Per-core partial sum of squared error into an (8,128) f32 accumulator."""

    def fold(sq, out_ref):
        if block_rows % SUBLANES == 0:
            # (block_rows,128) -> (block_rows//8, 8, 128), sum leading axis:
            # pure vreg-wise VPU adds, no XLU in steady state.
            out_ref[...] += jnp.sum(
                sq.reshape(block_rows // SUBLANES, SUBLANES, LANES), axis=0)
        else:
            # Tiny full-extent block (rows < 32, not a multiple of 8): one
            # cross-sublane reduce, negligible.
            out_ref[0:1, :] += jnp.sum(sq, axis=0, keepdims=True)

    def kernel(pred_ref, ref_ref, out_ref):
        c = pl.program_id(0)
        i = pl.program_id(1)
        t = c * tiles_per_core + i          # logical row-tile index

        @pl.when(i == 0)
        def _():
            out_ref[...] = jnp.zeros_like(out_ref)

        def accumulate(mask_tail: bool):
            d = (pred_ref[...].astype(jnp.float32)
                 - ref_ref[...].astype(jnp.float32))
            sq = d * d
            if mask_tail:
                rem = rows - t * block_rows          # valid rows in this tile
                row_idx = lax.broadcasted_iota(jnp.int32, (block_rows, LANES), 0)
                sq = jnp.where(row_idx < rem, sq, 0.0)
            fold(sq, out_ref)

        if needs_tail_mask:
            # Interior tiles: full, unmasked accumulate.
            @pl.when(t < num_row_tiles - 1)
            def _():
                accumulate(False)

            # The single genuine tail tile pays the row mask.
            @pl.when(t == num_row_tiles - 1)
            def _():
                accumulate(True)
            # Clamped duplicate tiles (t >= num_row_tiles) hit neither branch.
        elif has_clamped_tiles:
            # Duplicates only: skip the accumulate entirely, no iota/select.
            @pl.when(t < num_row_tiles)
            def _():
                accumulate(False)
        else:
            accumulate(False)

    return kernel


def psnr_pallas(pred, ref, *, data_range: float = 1.0, tile_rows=None):
    """PSNR with 'mean' reduction over all elements, computed in Pallas."""
    assert pred.shape == ref.shape, "pred/ref shape mismatch"
    total = int(pred.size)
    assert total > 0
    itemsize = jnp.dtype(pred.dtype).itemsize

    p = pred.reshape(-1)
    r = ref.reshape(-1)

    if total % LANES != 0:
        # No zero-copy lane-dense 2-D view exists; a pad/slice would copy the
        # whole array (~3x HBM traffic), so a single fused XLA reduction is
        # the fastest correct path for this rare case.
        # TODO(synk): native Pallas path for element counts not divisible by 128.
        mse = jnp.mean((p.astype(jnp.float32) - r.astype(jnp.float32)) ** 2)
        return _psnr_from_mse(mse, data_range)

    rows = total // LANES
    p2 = p.reshape(rows, LANES)   # zero-copy views
    r2 = r.reshape(rows, LANES)

    # Dtype-scaled block: ~2 MiB per input buffer (f32 -> 4096 rows, bf16 ->
    # 8192).  Always a multiple of 32 rows so bf16/int8/fp8 sublane packing is
    # legal, with a floor of 32.
    if tile_rows is None:
        tile_rows = TARGET_BLOCK_BYTES // (LANES * itemsize)
    tile_rows = max(ROW_ALIGN, (int(tile_rows) // ROW_ALIGN) * ROW_ALIGN)
    block_rows = rows if rows <= tile_rows else tile_rows

    num_row_tiles = pl.cdiv(rows, block_rows)
    num_cores = MAX_CORES if num_row_tiles >= MAX_CORES else 1
    tiles_per_core = pl.cdiv(num_row_tiles, num_cores)
    last_tile = num_row_tiles - 1
    needs_tail_mask = (rows % block_rows) != 0
    has_clamped_tiles = (num_cores * tiles_per_core) != num_row_tiles

    def in_map(c, i):
        # Clamp: tiles past the end just re-read the last real tile; the kernel
        # skips their accumulate so they contribute exactly 0.
        return (jnp.minimum(c * tiles_per_core + i, last_tile), 0)

    kernel = _make_sse_kernel(rows, block_rows, num_row_tiles, tiles_per_core,
                              needs_tail_mask, has_clamped_tiles)

    partials = pl.pallas_call(
        kernel,
        out_shape=jax.ShapeDtypeStruct((num_cores, SUBLANES, LANES), jnp.float32),
        grid_spec=pltpu.PrefetchScalarGridSpec(
            num_scalar_prefetch=0,
            grid=(num_cores, tiles_per_core),
            in_specs=[
                pl.BlockSpec((block_rows, LANES), in_map),
                pl.BlockSpec((block_rows, LANES), in_map),
            ],
            out_specs=pl.BlockSpec((None, SUBLANES, LANES),
                                   lambda c, i: (c, 0, 0)),
        ),
        compiler_params=pltpu.CompilerParams(
            # TODO(synk): on v7x, verify the leading axis actually shards over
            # both TensorCores; if a trace shows one idle TC, switch it to
            # pltpu.CORE_PARALLEL.
            dimension_semantics=("parallel", "arbitrary"),
        ),
        cost_estimate=pl.CostEstimate(
            flops=3 * total,
            transcendentals=0,
            bytes_accessed=2 * total * itemsize,
        ),
    )(p2, r2)

    # Tiny epilogue on <= 2*8*128 floats: combine partials, take logs, scale.
    sse = jnp.sum(partials)
    mse = sse / jnp.float32(total)
    return _psnr_from_mse(mse, data_range)


def psnr_reference(pred, ref, *, data_range: float = 1.0, base: float = 10.0):
    mse = jnp.mean((pred.astype(jnp.float32) - ref.astype(jnp.float32)) ** 2)
    psnr_base_e = 2.0 * jnp.log(jnp.float32(data_range)) - jnp.log(mse)
    return psnr_base_e * (base / jnp.log(jnp.float32(base)))


if __name__ == "__main__":
    key = jax.random.PRNGKey(0)
    k1, k2, k3, k4, k5, k6 = jax.random.split(key, 6)

    # --- Test 1: module-style NCHW f32 inputs, default (dtype-scaled) tiling --
    B, C, H, W = 2, 4, 16, 16
    pred = jax.random.uniform(k1, (B, C, H, W), dtype=jnp.float32)
    noise = 0.05 * jax.random.normal(k2, (B, C, H, W), dtype=jnp.float32)
    ref = jnp.clip(pred + noise, 0.0, 1.0)

    psnr = jax.block_until_ready(psnr_pallas(pred, ref, data_range=1.0))
    expected = psnr_reference(pred, ref, data_range=1.0)
    assert jnp.allclose(psnr, expected, rtol=1e-5, atol=1e-5), (psnr, expected)

    # --- Test 2: small tiles, odd tile count -> multi-tile + row-tail mask +
    #             clamped-duplicate skip + 2-way core axis ---------------------
    pred2 = jax.random.uniform(k3, (1, 3, 40, 96), dtype=jnp.float32)
    noise2 = 0.03 * jax.random.normal(k4, (1, 3, 40, 96), dtype=jnp.float32)
    ref2 = jnp.clip(pred2 + noise2, 0.0, 1.0)

    psnr2 = jax.block_until_ready(
        psnr_pallas(pred2, ref2, data_range=1.0, tile_rows=32))
    expected2 = psnr_reference(pred2, ref2, data_range=1.0)
    assert jnp.allclose(psnr2, expected2, rtol=1e-5, atol=1e-5), (psnr2, expected2)

    # --- Test 3: native bf16 inputs (kernel casts per-tile; bf16-scaled block) -
    pred3 = pred.astype(jnp.bfloat16)
    ref3 = ref.astype(jnp.bfloat16)
    psnr3 = jax.block_until_ready(psnr_pallas(pred3, ref3, data_range=1.0))
    expected3 = psnr_reference(pred3, ref3, data_range=1.0)
    assert jnp.allclose(psnr3, expected3, rtol=1e-5, atol=1e-5), (psnr3, expected3)

    # --- Test 4: tiny input whose row count is not a multiple of 8 ------------
    pred4 = jax.random.uniform(k5, (1, 1, 3, 128), dtype=jnp.float32)
    noise4 = 0.02 * jax.random.normal(k6, (1, 1, 3, 128), dtype=jnp.float32)
    ref4 = jnp.clip(pred4 + noise4, 0.0, 1.0)
    psnr4 = jax.block_until_ready(psnr_pallas(pred4, ref4, data_range=1.0))
    expected4 = psnr_reference(pred4, ref4, data_range=1.0)
    assert jnp.allclose(psnr4, expected4, rtol=1e-5, atol=1e-5), (psnr4, expected4)

    print("KERNEL_OK")
</pallas_src>

<mosaic_0001>
module attributes {stable_mosaic.version = 11 : i64} {
  func.func @kernel(%arg0: i32, %arg1: i32, %arg2: memref<16x128xf32, #tpu.memory_space<vmem>>, %arg3: memref<16x128xf32, #tpu.memory_space<vmem>>, %arg4: memref<1x8x128xf32, #tpu.memory_space<vmem>>) attributes {dimension_semantics = [#tpu.dimension_semantics<parallel>, #tpu.dimension_semantics<arbitrary>], iteration_bounds = array<i64: 1, 1>, scalar_prefetch = 0 : i64, scratch_operands = 0 : i64, tpu.core_type = #tpu.core_type<tc>, window_params = [{transform_indices = @transform_0, window_bounds = array<i64: 16, 128>}, {transform_indices = @transform_1, window_bounds = array<i64: 16, 128>}, {transform_indices = @transform_2, window_bounds = array<i64: 1, 8, 128>}]} {
    %c0_i32 = arith.constant 0 : i32
    %0 = arith.cmpi eq, %arg1, %c0_i32 : i32
    %1 = arith.extui %0 : i1 to i32
    %c0_i32_0 = arith.constant 0 : i32
    %2 = arith.cmpi ne, %1, %c0_i32_0 : i32
    scf.if %2 {
      %cst_10 = arith.constant 0.000000e+00 : f32
      %15 = vector.broadcast %cst_10 : f32 to vector<8x128xf32>
      %c0_11 = arith.constant 0 : index
      %c0_12 = arith.constant 0 : index
      %c0_13 = arith.constant 0 : index
      %16 = vector.load %arg4[%c0_11, %c0_12, %c0_13] : memref<1x8x128xf32, #tpu.memory_space<vmem>>, vector<1x8x128xf32>
      %17 = vector.shape_cast %16 : vector<1x8x128xf32> to vector<8x128xf32>
      %18 = vector.shape_cast %15 : vector<8x128xf32> to vector<1x8x128xf32>
      tpu.vector_store %arg4[%c0_11, %c0_12, %c0_13], %18 {strides = array<i32>} : memref<1x8x128xf32, #tpu.memory_space<vmem>>, vector<1x8x128xf32>,
    } else {
    }
    %c0 = arith.constant 0 : index
    %c0_1 = arith.constant 0 : index
    %3 = vector.load %arg2[%c0, %c0_1] : memref<16x128xf32, #tpu.memory_space<vmem>>, vector<16x128xf32>
    %c0_2 = arith.constant 0 : index
    %c0_3 = arith.constant 0 : index
    %4 = vector.load %arg3[%c0_2, %c0_3] : memref<16x128xf32, #tpu.memory_space<vmem>>, vector<16x128xf32>
    %5 = arith.subf %3, %4 : vector<16x128xf32>
    %6 = arith.mulf %5, %5 : vector<16x128xf32>
    %c0_4 = arith.constant 0 : index
    %c0_5 = arith.constant 0 : index
    %c0_6 = arith.constant 0 : index
    %7 = vector.load %arg4[%c0_4, %c0_5, %c0_6] : memref<1x8x128xf32, #tpu.memory_space<vmem>>, vector<1x8x128xf32>
    %8 = vector.shape_cast %7 : vector<1x8x128xf32> to vector<8x128xf32>
    %9 = vector.shape_cast %6 : vector<16x128xf32> to vector<2x8x128xf32>
    %cst = arith.constant dense<0.000000e+00> : vector<8x128xf32>
    %10 = vector.multi_reduction <add>, %9, %cst [0] : vector<2x8x128xf32> to vector<8x128xf32>
    %11 = arith.addf %8, %10 : vector<8x128xf32>
    %c0_7 = arith.constant 0 : index
    %c0_8 = arith.constant 0 : index
    %c0_9 = arith.constant 0 : index
    %12 = vector.load %arg4[%c0_7, %c0_8, %c0_9] : memref<1x8x128xf32, #tpu.memory_space<vmem>>, vector<1x8x128xf32>
    %13 = vector.shape_cast %12 : vector<1x8x128xf32> to vector<8x128xf32>
    %14 = vector.shape_cast %11 : vector<8x128xf32> to vector<1x8x128xf32>
    tpu.vector_store %arg4[%c0_7, %c0_8, %c0_9], %14 {strides = array<i32>} : memref<1x8x128xf32, #tpu.memory_space<vmem>>, vector<1x8x128xf32>,
    return
  }
  func.func @transform_0(%arg0: i32, %arg1: i32) -> (i32, i32) {
    %c1_i32 = arith.constant 1 : i32
    %0 = arith.muli %arg0, %c1_i32 : i32
    %1 = arith.addi %0, %arg1 : i32
    %c0_i32 = arith.constant 0 : i32
    %2 = arith.minsi %1, %c0_i32 : i32
    %c0_i32_0 = arith.constant 0 : i32
    %c0_i32_1 = arith.constant 0 : i32
    return %2, %c0_i32_0 : i32, i32
  }
  func.func @transform_1(%arg0: i32, %arg1: i32) -> (i32, i32) {
    %c1_i32 = arith.constant 1 : i32
    %0 = arith.muli %arg0, %c1_i32 : i32
    %1 = arith.addi %0, %arg1 : i32
    %c0_i32 = arith.constant 0 : i32
    %2 = arith.minsi %1, %c0_i32 : i32
    %c0_i32_0 = arith.constant 0 : i32
    %c0_i32_1 = arith.constant 0 : i32
    return %2, %c0_i32_0 : i32, i32
  }
  func.func @transform_2(%arg0: i32, %arg1: i32) -> (i32, i32, i32) {
    %c0_i32 = arith.constant 0 : i32
    %c0_i32_0 = arith.constant 0 : i32
    %c0_i32_1 = arith.constant 0 : i32
    return %arg0, %c0_i32, %c0_i32_0 : i32, i32, i32
  }
}

</mosaic_0001>

<llo_original>
// kernel: tpu_custom_call.1
$region0: #{tpu_custom_call.1}
  #allocation0 [shape = 'u32[]', space=smem, size = 0x4, offset = 0x4, fixed_abs, tag = 'smem constant byte address 0x4 - core index']
  #allocation1 [shape = 'u32[144,128]{1,0:T(1,128)}', space=vmem, size = 0x12000, scoped, tag = 'internal scratch']
  %s0 = inlined_call_operand.hbm [shape: f32[16,128], index: 0, kind: input, shape index: {}]
  %s1 = inlined_call_operand.hbm [shape: f32[16,128], index: 1, kind: input, shape index: {}]
  %s2 = inlined_call_operand.hbm [shape: f32[1,8,128], index: 2, kind: output, shape index: {}]
  %s3 = sld [smem:[#allocation0]]
  $region30: #{tpu_custom_call.1} parent=0
    _
  %s5 = ssub.s32 1, %s3
  %s6 = scalar_select 0, %s5, %s3
  $region1: #{tpu_custom_call.1} parent=0
    #allocation2 [shape = 'u8[8192]{0}', space=vmem, size = 0x2000, scoped, tag = 'input window, operand 0, single buffered']
    #allocation3 [shape = 's32[1]{0}', space=sflag, size = 0x4, scoped, tag = 'scoped memory for tpu_custom_call.1']
    #allocation4 [shape = 's32[1]{0}', space=sflag, size = 0x4, scoped, tag = 'scoped memory for tpu_custom_call.1']
    #allocation5 [shape = 'u8[8192]{0}', space=vmem, size = 0x2000, scoped, tag = 'input window, operand 1, single buffered']
    #allocation6 [shape = 's32[1]{0}', space=sflag, size = 0x4, scoped, tag = 'scoped memory for tpu_custom_call.1']
    #allocation7 [shape = 'u8[4096]{0}', space=vmem, size = 0x1000, scoped, tag = 'output window, operand 0, single buffered']
    %7 = vsyncpa [#allocation3], 0
    %8 = vsyncpa [#allocation6], 0
    %9 = vsyncpa [#allocation4], 0
    // Predicated region
    $region2: #{tpu_custom_call.1} parent=1 // pred_check
      _
    $region3: #{tpu_custom_call.1} parent=1 // pred_check_branch
      %11 = sbr.rel (0) target = $region5
    $region4: #{tpu_custom_call.1} parent=1 // pred_region
      %s12 = sadd.s32 0, 0
      %p13 = scmp.lt.s32.totalorder %s12, 0
      %s14 = scalar_select %p13, %s12, 0
      %s15 = smul.u32 2, %s14
      %s17 = ssub.s32 256, 256
      %18 = vsyncadd [#allocation3], %s17
      %s19 = smul.addr %s15, 128
      %s20 = scalar_lea.hbm %s0, %s19
      %s21 = sshll.u32 [#allocation2], 4
      %s22 = int_to_ptr.vmem [resolvable:$true] %s21
      %27 = dma.hbm_to_vmem [thread:$0]  %s20, 256, %s22, [#allocation3], 128, 128, 8
    $region5: #{tpu_custom_call.1} parent=1 // pred_fallthru
      _
    // Predicated region
    $region6: #{tpu_custom_call.1} parent=1 // pred_check
      _
    $region7: #{tpu_custom_call.1} parent=1 // pred_check_branch
      %29 = sbr.rel (0) target = $region9
    $region8: #{tpu_custom_call.1} parent=1 // pred_region
      %s30 = sadd.s32 0, 0
      %p31 = scmp.lt.s32.totalorder %s30, 0
      %s32 = scalar_select %p31, %s30, 0
      %s33 = smul.u32 2, %s32
      %s35 = ssub.s32 256, 256
      %36 = vsyncadd [#allocation6], %s35
      %s37 = smul.addr %s33, 128
      %s38 = scalar_lea.hbm %s1, %s37
      %s39 = sshll.u32 [#allocation5], 4
      %s40 = int_to_ptr.vmem [resolvable:$true] %s39
      %45 = dma.hbm_to_vmem [thread:$0]  %s38, 256, %s40, [#allocation6], 128, 128, 8
    $region9: #{tpu_custom_call.1} parent=1 // pred_fallthru
      _
    // Predicated region
    $region10: #{tpu_custom_call.1} parent=1 // pred_check
      _
    $region11: #{tpu_custom_call.1} parent=1 // pred_check_branch
      %47 = sbr.rel (0) target = $region13
    $region12: #{tpu_custom_call.1} parent=1 // pred_region
      %48 = dma.done [#allocation3], 256
    $region13: #{tpu_custom_call.1} parent=1 // pred_fallthru
      _
    // Predicated region
    $region14: #{tpu_custom_call.1} parent=1 // pred_check
      _
    $region15: #{tpu_custom_call.1} parent=1 // pred_check_branch
      %50 = sbr.rel (0) target = $region17
    $region16: #{tpu_custom_call.1} parent=1 // pred_region
      %51 = dma.done [#allocation6], 256
    $region17: #{tpu_custom_call.1} parent=1 // pred_fallthru
      _
    %s52 = sadd.s32 0, 0
    %p53 = scmp.lt.s32.totalorder %s52, 0
    %s54 = scalar_select %p53, %s52, 0
    %s55 = smul.u32 2, %s54
    %s56 = sadd.s32 0, 0
    %p57 = scmp.lt.s32.totalorder %s56, 0
    %s58 = scalar_select %p57, %s56, 0
    %s59 = smul.u32 2, %s58
    %p60 = scmp.eq.s32.totalorder 0, 0
    // Predicated region
    $region18: #{tpu_custom_call.1} parent=1 // pred_check
      %p61 = pneg %p60
    $region19: #{tpu_custom_call.1} parent=1 // pred_check_branch
      %63 = sbr.rel (%p61) target = $region21
    $region20: #{tpu_custom_call.1} parent=1 // pred_region
      %64 = vst [vmem:[#allocation7] sm:$0xff] 0.0
    $region21: #{tpu_custom_call.1} parent=1 // pred_fallthru
      _
    %v65 = vld [vmem:[#allocation2] sm:$0xff]
    %v66 = vld [vmem:[#allocation2 + $0x8] sm:$0xff]
    %v67 = vld [vmem:[#allocation5] sm:$0xff]
    %v68 = vld [vmem:[#allocation5 + $0x8] sm:$0xff]
    %v69 = vsub.f32 %v65, %v67
    %v70 = vsub.f32 %v66, %v68
    %v71 = vmul.f32 %v69, %v69
    %v72 = vmul.f32 %v70, %v70
    %v73 = vld [vmem:[#allocation7] sm:$0xff]
    %v74 = vadd.f32 %v71, %v72
    %v75 = vadd.f32 %v73, %v74
    %76 = vst [vmem:[#allocation7] sm:$0xff] %v75
    // Predicated region
    $region22: #{tpu_custom_call.1} parent=1 // pred_check
      _
    $region23: #{tpu_custom_call.1} parent=1 // pred_check_branch
      %78 = sbr.rel (0) target = $region25
    $region24: #{tpu_custom_call.1} parent=1 // pred_region
      %s80 = ssub.s32 128, 128
      %81 = vsyncadd [#allocation4], %s80
      %s83 = sshll.u32 [#allocation7], 4
      %s84 = int_to_ptr.vmem [resolvable:$true] %s83
      %86 = dma.vmem_to_hbm [thread:$0]  %s84, 128, %s2, [#allocation4]
    $region25: #{tpu_custom_call.1} parent=1 // pred_fallthru
      _
    // Predicated region
    $region26: #{tpu_custom_call.1} parent=1 // pred_check
      _
    $region27: #{tpu_custom_call.1} parent=1 // pred_check_branch
      %88 = sbr.rel (0) target = $region29
    $region28: #{tpu_custom_call.1} parent=1 // pred_region
      %89 = dma.done [#allocation4], 128
    $region29: #{tpu_custom_call.1} parent=1 // pred_fallthru
      _
    %90 = vsyncpa [#allocation3], 1
    %91 = vsyncpa [#allocation6], 1
    %92 = vsyncpa [#allocation4], 1

</llo_original>
